<compile_context>
chip_gen: v6e
topology: v6e:2x2x1
jax: 0.10.0
libtpu: 0.0.40
codegen_flags: <defaults>
</compile_context>

<pallas_src>
import functools

import jax
import jax.numpy as jnp
from jax import lax
from jax.experimental import pallas as pl
from jax.experimental.pallas import tpu as pltpu


def _round_up(x, m):
    return (x + m - 1) // m * m


# ----------------------------------------------------------------------------
# Fused single-pass kernel: whole (C, P) plane of one batch element in VMEM.
# ----------------------------------------------------------------------------
def _se_fused_kernel(x_ref, w1_ref, w2_ref, o_ref, *, inv_p):
    """x_ref: (1, C, P); w1_ref: (hd, C); w2_ref: (C, hd); o_ref: (1, C, P)."""
    x = x_ref[0]                                                    # (C, P)
    pooled = jnp.sum(x, axis=-1, keepdims=True) * inv_p             # (C, 1)
    h = jnp.maximum(
        jnp.dot(w1_ref[...], pooled,
                preferred_element_type=jnp.float32), 0.0)           # (hd, 1)
    s = jax.nn.sigmoid(
        jnp.dot(w2_ref[...], h,
                preferred_element_type=jnp.float32))                # (C, 1)
    o_ref[0] = (x * s).astype(o_ref.dtype)


# ----------------------------------------------------------------------------
# Tiled pass 1: spatial-sum accumulator + excitation MLP -> gate s (C, 1)
# ----------------------------------------------------------------------------
def _se_gate_kernel(x_ref, w1_ref, w2_ref, s_ref, acc_ref, *, inv_p, p_total, tp):
    """grid = (B, n_tiles); the P-reduction is the last ("arbitrary") axis.

    x_ref:  (1, C, TP) spatial tile (channels on sublanes, spatial on lanes)
    s_ref:  (1, C, 1)  per-(batch, channel) sigmoid gate
    acc_ref:(C, 1)     VMEM running spatial sum (persists across tile axis)
    """
    t = pl.program_id(1)

    @pl.when(t == 0)
    def _():
        acc_ref[...] = jnp.zeros_like(acc_ref)

    x = x_ref[0]                                                    # (C, TP)
    # Zero out-of-range lanes of a (possibly partial) final tile so padding
    # never pollutes the pooled statistics.
    lane = lax.broadcasted_iota(jnp.int32, x.shape, 1)
    x = jnp.where(lane < (p_total - t * tp), x, 0.0)
    acc_ref[...] += jnp.sum(x, axis=-1, keepdims=True)              # (C, 1)

    @pl.when(t == pl.num_programs(1) - 1)
    def _():
        pooled = acc_ref[...] * inv_p                               # (C, 1)
        h = jnp.maximum(
            jnp.dot(w1_ref[...], pooled,
                    preferred_element_type=jnp.float32), 0.0)       # (hd, 1)
        s_ref[0] = jax.nn.sigmoid(
            jnp.dot(w2_ref[...], h,
                    preferred_element_type=jnp.float32))            # (C, 1)


# ----------------------------------------------------------------------------
# Tiled pass 2: channel-wise recalibration  out = x * s
# ----------------------------------------------------------------------------
def _se_scale_kernel(x_ref, s_ref, o_ref):
    o_ref[0] = (x_ref[0] * s_ref[0]).astype(o_ref.dtype)   # (C,TP)*(C,1) bcast


# ----------------------------------------------------------------------------
# Wrapper
# ----------------------------------------------------------------------------
def se_block(x_nchw, w1, w2, *,
             fused_plane_bytes=4 * 2**20,     # single-pass if plane fits this
             tile_lane_bytes=2 * 2**20,       # per-buffer budget, tiled path
             vmem_limit_bytes=32 * 2**20):
    """SEBlock forward.

    x_nchw: (B, C, H, W)
    w1:     (C//r, C)  == nn.Linear(C, C//r, bias=False).weight
    w2:     (C, C//r)  == nn.Linear(C//r, C, bias=False).weight
    """
    B, C, H, W = x_nchw.shape
    hd = w1.shape[0]
    P = H * W
    itemsize = jnp.dtype(x_nchw.dtype).itemsize

    # (B, C, H, W) -> (B, C, P): free contiguous reshape, no data movement.
    x = x_nchw.reshape(B, C, P)

    plane_bytes = C * P * itemsize

    # ---- fast path: whole plane resident in VMEM, one read + one write -----
    if plane_bytes <= fused_plane_bytes:
        out = pl.pallas_call(
            functools.partial(_se_fused_kernel, inv_p=1.0 / float(P)),
            out_shape=jax.ShapeDtypeStruct((B, C, P), x.dtype),
            grid=(B,),
            in_specs=[
                pl.BlockSpec((1, C, P), lambda b: (b, 0, 0)),
                pl.BlockSpec((hd, C), lambda b: (0, 0)),
                pl.BlockSpec((C, hd), lambda b: (0, 0)),
            ],
            out_specs=pl.BlockSpec((1, C, P), lambda b: (b, 0, 0)),
            compiler_params=pltpu.CompilerParams(
                dimension_semantics=("parallel",),
                vmem_limit_bytes=vmem_limit_bytes),
        )(x, w1, w2)
        return out.reshape(B, C, H, W)

    # ---- general path: tile the spatial axis (lane-dense, multiple of 128) --
    lanes_budget = max(128, tile_lane_bytes // (C * itemsize))
    TP = max(128, min(_round_up(P, 128), lanes_budget // 128 * 128))
    n_tiles = pl.cdiv(P, TP)

    # pass 1: squeeze + excitation -> gate s (B, C, 1)
    s = pl.pallas_call(
        functools.partial(_se_gate_kernel, inv_p=1.0 / float(P),
                          p_total=P, tp=TP),
        out_shape=jax.ShapeDtypeStruct((B, C, 1), jnp.float32),
        grid=(B, n_tiles),
        in_specs=[
            pl.BlockSpec((1, C, TP), lambda b, t: (b, 0, t)),
            pl.BlockSpec((hd, C), lambda b, t: (0, 0)),
            pl.BlockSpec((C, hd), lambda b, t: (0, 0)),
        ],
        out_specs=pl.BlockSpec((1, C, 1), lambda b, t: (b, 0, 0)),
        scratch_shapes=[pltpu.VMEM((C, 1), jnp.float32)],
        compiler_params=pltpu.CompilerParams(
            dimension_semantics=("parallel", "arbitrary"),
            vmem_limit_bytes=vmem_limit_bytes),
    )(x, w1, w2)

    # pass 2: recalibration x * s (fully parallel, lane-dense stores)
    out = pl.pallas_call(
        _se_scale_kernel,
        out_shape=jax.ShapeDtypeStruct((B, C, P), x.dtype),
        grid=(B, n_tiles),
        in_specs=[
            pl.BlockSpec((1, C, TP), lambda b, t: (b, 0, t)),
            pl.BlockSpec((1, C, 1), lambda b, t: (b, 0, 0)),
        ],
        out_specs=pl.BlockSpec((1, C, TP), lambda b, t: (b, 0, t)),
        compiler_params=pltpu.CompilerParams(
            dimension_semantics=("parallel", "parallel"),
            vmem_limit_bytes=vmem_limit_bytes),
    )(x, s)

    return out.reshape(B, C, H, W)


if __name__ == "__main__":
    key = jax.random.PRNGKey(0)
    kx, k1, k2 = jax.random.split(key, 3)

    B, C, H, W = 2, 128, 16, 16        # SEBlock(128, reduction=16) -> hidden 8
    reduction = 16
    hd = C // reduction

    x = jax.random.normal(kx, (B, C, H, W), dtype=jnp.float32)
    w1 = 0.1 * jax.random.normal(k1, (hd, C), dtype=jnp.float32)  # Linear(C, hd).weight
    w2 = 0.1 * jax.random.normal(k2, (C, hd), dtype=jnp.float32)  # Linear(hd, C).weight

    # plain-JAX reference
    pooled = jnp.mean(x, axis=(2, 3))                              # (B, C)
    h = jnp.maximum(pooled @ w1.T, 0.0)
    gate = jax.nn.sigmoid(h @ w2.T)
    y_ref = x * gate[:, :, None, None]

    # 1) fused single-pass path (plane fits VMEM)
    fwd_fused = jax.jit(functools.partial(se_block, w1=w1, w2=w2))
    y1 = jax.block_until_ready(fwd_fused(x))

    # 2) tiled two-pass path (force small tiles so the accumulator is exercised)
    fwd_tiled = jax.jit(functools.partial(
        se_block, w1=w1, w2=w2,
        fused_plane_bytes=0, tile_lane_bytes=128 * C * 4))
    y2 = jax.block_until_ready(fwd_tiled(x))

    for y in (y1, y2):
        assert y.shape == (B, C, H, W), y.shape
        assert bool(jnp.all(jnp.isfinite(y)))
        assert jnp.allclose(y, y_ref, atol=1e-4, rtol=1e-4), \
            float(jnp.max(jnp.abs(y - y_ref)))
    print("KERNEL_OK")
</pallas_src>

<mosaic_0001>
module attributes {stable_mosaic.version = 11 : i64} {
  func.func @_se_fused_kernel(%arg0: i32, %arg1: memref<1x128x256xf32, #tpu.memory_space<vmem>>, %arg2: memref<8x128xf32, #tpu.memory_space<vmem>>, %arg3: memref<128x8xf32, #tpu.memory_space<vmem>>, %arg4: memref<1x128x256xf32, #tpu.memory_space<vmem>>) attributes {dimension_semantics = [#tpu.dimension_semantics<parallel>], iteration_bounds = array<i64: 2>, scalar_prefetch = 0 : i64, scratch_operands = 0 : i64, tpu.core_type = #tpu.core_type<tc>, window_params = [{transform_indices = @transform_0, window_bounds = array<i64: 1, 128, 256>}, {pipeline_mode = #tpu.pipeline_mode<synchronous>, transform_indices = @transform_1, window_bounds = array<i64: 8, 128>}, {pipeline_mode = #tpu.pipeline_mode<synchronous>, transform_indices = @transform_2, window_bounds = array<i64: 128, 8>}, {transform_indices = @transform_3, window_bounds = array<i64: 1, 128, 256>}]} {
    %c0 = arith.constant 0 : index
    %c0_0 = arith.constant 0 : index
    %c0_1 = arith.constant 0 : index
    %0 = vector.load %arg1[%c0, %c0_0, %c0_1] : memref<1x128x256xf32, #tpu.memory_space<vmem>>, vector<1x128x256xf32>
    %1 = vector.shape_cast %0 : vector<1x128x256xf32> to vector<128x256xf32>
    %cst = arith.constant dense<0.000000e+00> : vector<128xf32>
    %2 = vector.multi_reduction <add>, %1, %cst [1] : vector<128x256xf32> to vector<128xf32>
    %3 = vector.shape_cast %2 : vector<128xf32> to vector<128x1xf32>
    %cst_2 = arith.constant 3.906250e-03 : f32
    %4 = vector.broadcast %cst_2 : f32 to vector<128x1xf32>
    %5 = arith.mulf %3, %4 : vector<128x1xf32>
    %c0_3 = arith.constant 0 : index
    %c0_4 = arith.constant 0 : index
    %6 = vector.load %arg2[%c0_3, %c0_4] : memref<8x128xf32, #tpu.memory_space<vmem>>, vector<8x128xf32>
    %cst_5 = arith.constant dense<0.000000e+00> : vector<8x1xf32>
    %7 = tpu.matmul %6, %5, %cst_5 {dimension_numbers = #tpu.dot_dimension_numbers<[1], [0], [0], [1], [0, 0, 1, 1], [], []>} : vector<8x128xf32>, vector<128x1xf32>, vector<8x1xf32> -> vector<8x1xf32>
    %cst_6 = arith.constant 0.000000e+00 : f32
    %8 = vector.broadcast %cst_6 : f32 to vector<8x1xf32>
    %9 = arith.maximumf %7, %8 : vector<8x1xf32>
    %c0_7 = arith.constant 0 : index
    %c0_8 = arith.constant 0 : index
    %10 = vector.load %arg3[%c0_7, %c0_8] : memref<128x8xf32, #tpu.memory_space<vmem>>, vector<128x8xf32>
    %cst_9 = arith.constant dense<0.000000e+00> : vector<128x1xf32>
    %11 = tpu.matmul %10, %9, %cst_9 {dimension_numbers = #tpu.dot_dimension_numbers<[1], [0], [0], [1], [0, 0, 1, 1], [], []>} : vector<128x8xf32>, vector<8x1xf32>, vector<128x1xf32> -> vector<128x1xf32>
    %12 = arith.negf %11 : vector<128x1xf32>
    %13 = math.exp %12 : vector<128x1xf32>
    %cst_10 = arith.constant 1.000000e+00 : f32
    %14 = vector.broadcast %cst_10 : f32 to vector<128x1xf32>
    %15 = arith.addf %14, %13 : vector<128x1xf32>
    %16 = arith.divf %14, %15 : vector<128x1xf32>
    %17 = vector.broadcast %16 : vector<128x1xf32> to vector<128x256xf32>
    %18 = arith.mulf %1, %17 : vector<128x256xf32>
    %c0_11 = arith.constant 0 : index
    %c0_12 = arith.constant 0 : index
    %c0_13 = arith.constant 0 : index
    %19 = vector.load %arg4[%c0_11, %c0_12, %c0_13] : memref<1x128x256xf32, #tpu.memory_space<vmem>>, vector<1x128x256xf32>
    %20 = vector.shape_cast %19 : vector<1x128x256xf32> to vector<128x256xf32>
    %21 = vector.shape_cast %18 : vector<128x256xf32> to vector<1x128x256xf32>
    tpu.vector_store %arg4[%c0_11, %c0_12, %c0_13], %21 {strides = array<i32>} : memref<1x128x256xf32, #tpu.memory_space<vmem>>, vector<1x128x256xf32>,
    return
  }
  func.func @transform_0(%arg0: i32) -> (i32, i32, i32) {
    %c0_i32 = arith.constant 0 : i32
    %c0_i32_0 = arith.constant 0 : i32
    %c0_i32_1 = arith.constant 0 : i32
    return %arg0, %c0_i32, %c0_i32_0 : i32, i32, i32
  }
  func.func @transform_1(%arg0: i32) -> (i32, i32) {
    %c0_i32 = arith.constant 0 : i32
    %c0_i32_0 = arith.constant 0 : i32
    %c0_i32_1 = arith.constant 0 : i32
    return %c0_i32, %c0_i32_0 : i32, i32
  }
  func.func @transform_2(%arg0: i32) -> (i32, i32) {
    %c0_i32 = arith.constant 0 : i32
    %c0_i32_0 = arith.constant 0 : i32
    %c0_i32_1 = arith.constant 0 : i32
    return %c0_i32, %c0_i32_0 : i32, i32
  }
  func.func @transform_3(%arg0: i32) -> (i32, i32, i32) {
    %c0_i32 = arith.constant 0 : i32
    %c0_i32_0 = arith.constant 0 : i32
    %c0_i32_1 = arith.constant 0 : i32
    return %arg0, %c0_i32, %c0_i32_0 : i32, i32, i32
  }
}

</mosaic_0001>

<llo_original>
// kernel: se_block.1
$region0: #{se_block.1}
  #allocation0 [shape = 'u32[]', space=smem, size = 0x4, offset = 0x4, fixed_abs, tag = 'smem constant byte address 0x4 - core index']
  #allocation1 [shape = 'u32[144,128]{1,0:T(1,128)}', space=vmem, size = 0x12000, scoped, tag = 'internal scratch']
  %s0 = inlined_call_operand.vmem [shape: f32[2,128,256], index: 0, kind: input, shape index: {}]
  %s1 = inlined_call_operand.vmem [shape: f32[8,128], index: 1, kind: input, shape index: {}]
  %s2 = inlined_call_operand.vmem [shape: f32[128,8], index: 2, kind: input, shape index: {}]
  %s3 = inlined_call_operand.vmem [shape: f32[2,128,256], index: 3, kind: output, shape index: {}]
  %s4 = sld [smem:[#allocation0]]
  $region45: #{se_block.1} parent=0
    _
  %s6 = ssub.s32 1, %s4
  %s7 = scalar_select 0, %s6, %s4
  loop: start=0, step=1, limit=4
  $region2: #{se_block.1} parent=0 // loop_pre_header
    _
  $region3: #{se_block.1} parent=0 // loop_header
    %s9 = sphi 0, %s13
    %p10 = scmp.ge.s32.totalorder %s9, 4
    %s19 = sphi 0, %s21
    %s22 = sphi 0, %s19
    %s23 = sphi 0, %s22
    %s39 = sphi 0, %s23
    %s43 = sphi 0, %s43
    %s45 = sphi 0, %s43
    %s46 = sphi 0, %s45
    %s60 = sphi 0, %s46
    %s64 = sphi 0, %s64
    %s66 = sphi 0, %s64
    %s67 = sphi 0, %s66
    %s81 = sphi 0, %s67
    %s87 = sphi 0, %s89
    %s90 = sphi 0, %s87
    %s91 = sphi 0, %s90
    %s107 = sphi 0, %s91
  $region4: #{se_block.1} parent=0 // loop_header_branch
    %12 = sbr.rel (%p10) target = $region8
  $region5: #{se_block.1} parent=0 // loop_body
    %s14 = ssub.s32 %s9, 1
    %s15 = ssub.s32 %s9, 2
    %s16 = sadd.s32 %s9, 1
    %s17 = ssub.s32 %s9, %s16
    %p18 = scmp.eq.s32.totalorder %s17, 0
    %s20 = sadd.s32 %s19, 1
    %s21 = scalar_select %p18, %s19, %s20
    %p24 = pneg %p18
    %p25 = scmp.eq.s32.totalorder %s9, 1
    %p26 = por %p24, %p25
    %p27 = scmp.ne.s32.totalorder %s19, %s22
    %p28 = scmp.eq.s32.totalorder %s9, 0
    %p29 = por %p27, %p28
    %p30 = scmp.ne.s32.totalorder %s19, %s22
    %p31 = scmp.eq.s32.totalorder %s14, 1
    %p32 = por %p30, %p31
    %p33 = scmp.ne.s32.totalorder %s22, %s23
    %p34 = scmp.eq.s32.totalorder %s14, 0
    %p35 = por %p33, %p34
    %p36 = scmp.ne.s32.totalorder %s22, %s23
    %p37 = scmp.eq.s32.totalorder %s15, 1
    %p38 = por %p36, %p37
    %p40 = scmp.ne.s32.totalorder %s23, %s39
    %p41 = scmp.eq.s32.totalorder %s15, 0
    %p42 = por %p40, %p41
    %s44 = sadd.s32 %s43, 1
    %p47 = scmp.eq.s32.totalorder %s9, 1
    %p48 = scmp.ne.s32.totalorder %s43, %s45
    %p49 = scmp.eq.s32.totalorder %s9, 0
    %p50 = por %p48, %p49
    %p51 = scmp.ne.s32.totalorder %s43, %s45
    %p52 = scmp.eq.s32.totalorder %s14, 1
    %p53 = por %p51, %p52
    %p54 = scmp.ne.s32.totalorder %s45, %s46
    %p55 = scmp.eq.s32.totalorder %s14, 0
    %p56 = por %p54, %p55
    %p57 = scmp.ne.s32.totalorder %s45, %s46
    %p58 = scmp.eq.s32.totalorder %s15, 1
    %p59 = por %p57, %p58
    %p61 = scmp.ne.s32.totalorder %s46, %s60
    %p62 = scmp.eq.s32.totalorder %s15, 0
    %p63 = por %p61, %p62
    %s65 = sadd.s32 %s64, 1
    %p68 = scmp.eq.s32.totalorder %s9, 1
    %p69 = scmp.ne.s32.totalorder %s64, %s66
    %p70 = scmp.eq.s32.totalorder %s9, 0
    %p71 = por %p69, %p70
    %p72 = scmp.ne.s32.totalorder %s64, %s66
    %p73 = scmp.eq.s32.totalorder %s14, 1
    %p74 = por %p72, %p73
    %p75 = scmp.ne.s32.totalorder %s66, %s67
    %p76 = scmp.eq.s32.totalorder %s14, 0
    %p77 = por %p75, %p76
    %p78 = scmp.ne.s32.totalorder %s66, %s67
    %p79 = scmp.eq.s32.totalorder %s15, 1
    %p80 = por %p78, %p79
    %p82 = scmp.ne.s32.totalorder %s67, %s81
    %p83 = scmp.eq.s32.totalorder %s15, 0
    %p84 = por %p82, %p83
    %s85 = ssub.s32 %s9, %s16
    %p86 = scmp.eq.s32.totalorder %s85, 0
    %s88 = sadd.s32 %s87, 1
    %s89 = scalar_select %p86, %s87, %s88
    %p92 = pneg %p86
    %p93 = scmp.eq.s32.totalorder %s9, 1
    %p94 = por %p92, %p93
    %p95 = scmp.ne.s32.totalorder %s87, %s90
    %p96 = scmp.eq.s32.totalorder %s9, 0
    %p97 = por %p95, %p96
    %p98 = scmp.ne.s32.totalorder %s87, %s90
    %p99 = scmp.eq.s32.totalorder %s14, 1
    %p100 = por %p98, %p99
    %p101 = scmp.ne.s32.totalorder %s90, %s91
    %p102 = scmp.eq.s32.totalorder %s14, 0
    %p103 = por %p101, %p102
    %p104 = scmp.ne.s32.totalorder %s90, %s91
    %p105 = scmp.eq.s32.totalorder %s15, 1
    %p106 = por %p104, %p105
    %p108 = scmp.ne.s32.totalorder %s91, %s107
    %p109 = scmp.eq.s32.totalorder %s15, 0
    %p110 = por %p108, %p109
    %p111 = scmp.le.s32.totalorder 1, %s9
    %p112 = scmp.lt.s32.totalorder %s9, 3
    %p113 = pnand %p111, %p112
    %p114 = pneg %p113
    // Predicated region
    $region9: #{se_block.1} parent=5 // pred_check
      _
    $region10: #{se_block.1} parent=5 // pred_check_branch
      %116 = sbr.rel (%p113) target = $region12
    $region11: #{se_block.1} parent=5 // pred_region
      %s117 = ssub.s32 %s9, 1
      // Predicated region
      $region13: #{se_block.1} parent=11 // pred_check
        %p118 = pneg %p56
      $region14: #{se_block.1} parent=11 // pred_check_branch
        %120 = sbr.rel (%p118) target = $region16
      $region15: #{se_block.1} parent=11 // pred_region
        _
      $region16: #{se_block.1} parent=11 // pred_fallthru
        _
      // Predicated region
      $region17: #{se_block.1} parent=11 // pred_check
        %p121 = pneg %p77
      $region18: #{se_block.1} parent=11 // pred_check_branch
        %123 = sbr.rel (%p121) target = $region20
      $region19: #{se_block.1} parent=11 // pred_region
        _
      $region20: #{se_block.1} parent=11 // pred_fallthru
        _
    $region12: #{se_block.1} parent=5 // pred_fallthru
      _
    %p124 = scmp.lt.s32.totalorder %s9, 2
    // Predicated region
    $region21: #{se_block.1} parent=5 // pred_check
      %p125 = pneg %p124
    $region22: #{se_block.1} parent=5 // pred_check_branch
      %127 = sbr.rel (%p125) target = $region24
    $region23: #{se_block.1} parent=5 // pred_region
      // Predicated region
      $region25: #{se_block.1} parent=23 // pred_check
        %p128 = pneg %p29
      $region26: #{se_block.1} parent=23 // pred_check_branch
        %130 = sbr.rel (%p128) target = $region28
      $region27: #{se_block.1} parent=23 // pred_region
        %p131 = scmp.lt.s32.totalorder %s9, 1
        %s132 = scalar_select %p131, %s9, 1
        %s133 = smul.addr %s132, 32
        %s134 = smul.addr %s133, 8
        %s135 = scalar_lea.vmem %s0, %s134
      $region28: #{se_block.1} parent=23 // pred_fallthru
        _
    $region24: #{se_block.1} parent=5 // pred_fallthru
      _
    %p136 = scmp.le.s32.totalorder 1, %s9
    %p137 = scmp.lt.s32.totalorder %s9, 3
    %p138 = pnand %p136, %p137
    %p139 = pneg %p138
    // Predicated region
    $region29: #{se_block.1} parent=5 // pred_check
      _
    $region30: #{se_block.1} parent=5 // pred_check_branch
      %141 = sbr.rel (%p138) target = $region32
    $region31: #{se_block.1} parent=5 // pred_region
      %s142 = ssub.s32 %s9, 1
      %p143 = scmp.lt.s32.totalorder %s14, 1
      %s144 = scalar_select %p143, %s14, 1
      %s145 = smul.addr %s144, 32
      %s146 = smul.addr %s145, 8
      %s147 = scalar_lea.vmem %s0, %s146
      %p148 = pneg %p35
      %p149 = pneg %p32
      %p150 = pneg %p56
      %p151 = pneg %p53
      %p152 = pneg %p77
      %p153 = pneg %p74
      %p154 = pneg %p103
      %p155 = pneg %p100
      %p156 = scmp.lt.s32.totalorder %s14, 1
      %s157 = scalar_select %p156, %s14, 1
      %s158 = smul.addr %s157, 32
      %s159 = smul.addr %s158, 8
      %s160 = scalar_lea.vmem %s3, %s159
      %p161 = scmp.lt.s32.totalorder %s14, 1
      %s162 = scalar_select %p161, %s14, 1
      %s163 = smul.addr %s162, 32
      %s164 = smul.addr %s163, 8
      %s165 = scalar_lea.vmem %s0, %s164
      %p166 = scmp.lt.s32.totalorder %s14, 1
      %s167 = scalar_select %p166, %s14, 1
      %s168 = smul.addr %s167, 32
      %s169 = smul.addr %s168, 8
      %s170 = scalar_lea.vmem %s3, %s169
      %v171 = vld [vmem:[%s165] sm:$0xff]
      %v172 = vld [vmem:[%s165 + $0x8] sm:$0xff]
      %v173 = vld [vmem:[%s165 + $0x10] sm:$0xff]
      %v174 = vld [vmem:[%s165 + $0x18] sm:$0xff]
      %v175 = vld [vmem:[%s165 + $0x20] sm:$0xff]
      %v176 = vld [vmem:[%s165 + $0x28] sm:$0xff]
      %v177 = vld [vmem:[%s165 + $0x30] sm:$0xff]
      %v178 = vld [vmem:[%s165 + $0x38] sm:$0xff]
      %v179 = vld [vmem:[%s165 + $0x40] sm:$0xff]
      %v180 = vld [vmem:[%s165 + $0x48] sm:$0xff]
      %v181 = vld [vmem:[%s165 + $0x50] sm:$0xff]
      %v182 = vld [vmem:[%s165 + $0x58] sm:$0xff]
      %v183 = vld [vmem:[%s165 + $0x60] sm:$0xff]
      %v184 = vld [vmem:[%s165 + $0x68] sm:$0xff]
      %v185 = vld [vmem:[%s165 + $0x70] sm:$0xff]
      %v186 = vld [vmem:[%s165 + $0x78] sm:$0xff]
      %v187 = vld [vmem:[%s165 + $0x80] sm:$0xff]
      %v188 = vld [vmem:[%s165 + $0x88] sm:$0xff]
      %v189 = vld [vmem:[%s165 + $0x90] sm:$0xff]
      %v190 = vld [vmem:[%s165 + $0x98] sm:$0xff]
      %v191 = vld [vmem:[%s165 + $0xa0] sm:$0xff]
      %v192 = vld [vmem:[%s165 + $0xa8] sm:$0xff]
      %v193 = vld [vmem:[%s165 + $0xb0] sm:$0xff]
      %v194 = vld [vmem:[%s165 + $0xb8] sm:$0xff]
      %v195 = vld [vmem:[%s165 + $0xc0] sm:$0xff]
      %v196 = vld [vmem:[%s165 + $0xc8] sm:$0xff]
      %v197 = vld [vmem:[%s165 + $0xd0] sm:$0xff]
      %v198 = vld [vmem:[%s165 + $0xd8] sm:$0xff]
      %v199 = vld [vmem:[%s165 + $0xe0] sm:$0xff]
      %v200 = vld [vmem:[%s165 + $0xe8] sm:$0xff]
      %v201 = vld [vmem:[%s165 + $0xf0] sm:$0xff]
      %v202 = vld [vmem:[%s165 + $0xf8] sm:$0xff]
      %v203 = vadd.f32 %v171, %v172
      %204 = vadd.xlane.f32.xlu0 %v203
      %v205 = vpop.xlane.xlu0 %204
      %v206 = vadd.f32 %v173, %v174
      %207 = vadd.xlane.f32.xlu0 %v206
      %v208 = vpop.xlane.xlu0 %207
      %v209 = vadd.f32 %v175, %v176
      %210 = vadd.xlane.f32.xlu0 %v209
      %v211 = vpop.xlane.xlu0 %210
      %v212 = vadd.f32 %v177, %v178
      %213 = vadd.xlane.f32.xlu0 %v212
      %v214 = vpop.xlane.xlu0 %213
      %v215 = vadd.f32 %v179, %v180
      %216 = vadd.xlane.f32.xlu0 %v215
      %v217 = vpop.xlane.xlu0 %216
      %v218 = vadd.f32 %v181, %v182
      %219 = vadd.xlane.f32.xlu0 %v218
      %v220 = vpop.xlane.xlu0 %219
      %v221 = vadd.f32 %v183, %v184
      %222 = vadd.xlane.f32.xlu0 %v221
      %v223 = vpop.xlane.xlu0 %222
      %v224 = vadd.f32 %v185, %v186
      %225 = vadd.xlane.f32.xlu0 %v224
      %v226 = vpop.xlane.xlu0 %225
      %v227 = vadd.f32 %v187, %v188
      %228 = vadd.xlane.f32.xlu0 %v227
      %v229 = vpop.xlane.xlu0 %228
      %v230 = vadd.f32 %v189, %v190
      %231 = vadd.xlane.f32.xlu0 %v230
      %v232 = vpop.xlane.xlu0 %231
      %v233 = vadd.f32 %v191, %v192
      %234 = vadd.xlane.f32.xlu0 %v233
      %v235 = vpop.xlane.xlu0 %234
      %v236 = vadd.f32 %v193, %v194
      %237 = vadd.xlane.f32.xlu0 %v236
      %v238 = vpop.xlane.xlu0 %237
      %v239 = vadd.f32 %v195, %v196
      %240 = vadd.xlane.f32.xlu0 %v239
      %v241 = vpop.xlane.xlu0 %240
      %v242 = vadd.f32 %v197, %v198
      %243 = vadd.xlane.f32.xlu0 %v242
      %v244 = vpop.xlane.xlu0 %243
      %v245 = vadd.f32 %v199, %v200
      %246 = vadd.xlane.f32.xlu0 %v245
      %v247 = vpop.xlane.xlu0 %246
      %v248 = vadd.f32 %v201, %v202
      %249 = vadd.xlane.f32.xlu0 %v248
      %v250 = vpop.xlane.xlu0 %249
      %v251 = vmul.f32 %v205, 0.00390625
      %v252 = vmul.f32 %v208, 0.00390625
      %v253 = vmul.f32 %v211, 0.00390625
      %v254 = vmul.f32 %v214, 0.00390625
      %v255 = vmul.f32 %v217, 0.00390625
      %v256 = vmul.f32 %v220, 0.00390625
      %v257 = vmul.f32 %v223, 0.00390625
      %v258 = vmul.f32 %v226, 0.00390625
      %v259 = vmul.f32 %v229, 0.00390625
      %v260 = vmul.f32 %v232, 0.00390625
      %v261 = vmul.f32 %v235, 0.00390625
      %v262 = vmul.f32 %v238, 0.00390625
      %v263 = vmul.f32 %v241, 0.00390625
      %v264 = vmul.f32 %v244, 0.00390625
      %v265 = vmul.f32 %v247, 0.00390625
      %v266 = vmul.f32 %v250, 0.00390625
      %v267 = vld [vmem:[%s1] sm:$0xff]
      %268 = vmatprep.subr.mxu0 0.0
      %269 = vmatpush1.msra.mxu0 %v266
      %270 = vmatprep.subr.mxu0 0.0
      %271 = vmatpush1.msra.mxu0 %v265
      %272 = vmatprep.subr.mxu0 0.0
      %273 = vmatpush1.msra.mxu0 %v264
      %274 = vmatprep.subr.mxu0 0.0
      %275 = vmatpush1.msra.mxu0 %v263
      %276 = vmatprep.subr.mxu0 0.0
      %277 = vmatpush1.msra.mxu0 %v262
      %278 = vmatprep.subr.mxu0 0.0
      %279 = vmatpush1.msra.mxu0 %v261
      %280 = vmatprep.subr.mxu0 0.0
      %281 = vmatpush1.msra.mxu0 %v260
      %282 = vmatprep.subr.mxu0 0.0
      %283 = vmatpush1.msra.mxu0 %v259
      %284 = vmatprep.subr.mxu0 0.0
      %285 = vmatpush1.msra.mxu0 %v258
      %286 = vmatprep.subr.mxu0 0.0
      %287 = vmatpush1.msra.mxu0 %v257
      %288 = vmatprep.subr.mxu0 0.0
      %289 = vmatpush1.msra.mxu0 %v256
      %290 = vmatprep.subr.mxu0 0.0
      %291 = vmatpush1.msra.mxu0 %v255
      %292 = vmatprep.subr.mxu0 0.0
      %293 = vmatpush1.msra.mxu0 %v254
      %294 = vmatprep.subr.mxu0 0.0
      %295 = vmatpush1.msra.mxu0 %v253
      %296 = vmatprep.subr.mxu0 0.0
      %297 = vmatpush1.msra.mxu0 %v252
      %298 = vmatprep.subr.mxu0 0.0
      %299 = vmatpush1.msra.mxu0 %v251
      %300 = vmatprep.subr.mxu0 0.0
      %301 = vmatpush2.msra.mxu0 0.0
      %302 = vmatprep.subr.mxu0 0.0
      %303 = vmatpush2.msra.mxu0 0.0
      %304 = vmatprep.subr.mxu0 0.0
      %305 = vmatpush2.msra.mxu0 0.0
      %306 = vmatprep.subr.mxu0 0.0
      %307 = vmatpush2.msra.mxu0 0.0
      %308 = vmatprep.subr.mxu0 0.0
      %309 = vmatpush2.msra.mxu0 0.0
      %310 = vmatprep.subr.mxu0 0.0
      %311 = vmatpush2.msra.mxu0 0.0
      %312 = vmatprep.subr.mxu0 0.0
      %313 = vmatpush2.msra.mxu0 0.0
      %314 = vmatprep.subr.mxu0 0.0
      %315 = vmatpush2.msra.mxu0 0.0
      %316 = vmatprep.subr.mxu0 0.0
      %317 = vmatpush2.msra.mxu0 0.0
      %318 = vmatprep.subr.mxu0 0.0
      %319 = vmatpush2.msra.mxu0 0.0
      %320 = vmatprep.subr.mxu0 0.0
      %321 = vmatpush2.msra.mxu0 0.0
      %322 = vmatprep.subr.mxu0 0.0
      %323 = vmatpush2.msra.mxu0 0.0
      %324 = vmatprep.subr.mxu0 0.0
      %325 = vmatpush2.msra.mxu0 0.0
      %326 = vmatprep.subr.mxu0 0.0
      %327 = vmatpush2.msra.mxu0 0.0
      %328 = vmatprep.subr.mxu0 0.0
      %329 = vmatpush2.msra.mxu0 0.0
      %330 = vmatprep.subr.mxu0 0.0
      %331 = vmatpush2.msra.mxu0 0.0
      %332 = vmatprep.mubr.f32.mxu0 0.0
      %333 = vmatmul.mubr.f32.gmra.mxu0 %v267
      %v334 = vpop.f32.mrf.mxu0
      %v335 = vadd.f32 0.0, %v334
      %v336 = vpop.f32.mrf.mxu0
      %337 = vdwg.mxu0
      %v338 = vmax.f32 %v335, 0.0
      %v339 = vld [vmem:[%s2] sm:$0xff]
      %v340 = vld [vmem:[%s2 + $0x8] sm:$0xff]
      %v341 = vld [vmem:[%s2 + $0x10] sm:$0xff]
      %v342 = vld [vmem:[%s2 + $0x18] sm:$0xff]
      %v343 = vld [vmem:[%s2 + $0x20] sm:$0xff]
      %v344 = vld [vmem:[%s2 + $0x28] sm:$0xff]
      %v345 = vld [vmem:[%s2 + $0x30] sm:$0xff]
      %v346 = vld [vmem:[%s2 + $0x38] sm:$0xff]
      %v347 = vld [vmem:[%s2 + $0x40] sm:$0xff]
      %v348 = vld [vmem:[%s2 + $0x48] sm:$0xff]
      %v349 = vld [vmem:[%s2 + $0x50] sm:$0xff]
      %v350 = vld [vmem:[%s2 + $0x58] sm:$0xff]
      %v351 = vld [vmem:[%s2 + $0x60] sm:$0xff]
      %v352 = vld [vmem:[%s2 + $0x68] sm:$0xff]
      %v353 = vld [vmem:[%s2 + $0x70] sm:$0xff]
      %v354 = vld [vmem:[%s2 + $0x78] sm:$0xff]
      %vm355 = vcmask 64512
      %v357 = vsel %vm355, %v339, 0
      %v360 = vsel %vm355, %v340, 0
      %v363 = vsel %vm355, %v341, 0
      %v366 = vsel %vm355, %v342, 0
      %v369 = vsel %vm355, %v343, 0
      %v372 = vsel %vm355, %v344, 0
      %v375 = vsel %vm355, %v345, 0
      %v378 = vsel %vm355, %v346, 0
      %v381 = vsel %vm355, %v347, 0
      %v384 = vsel %vm355, %v348, 0
      %v387 = vsel %vm355, %v349, 0
      %v390 = vsel %vm355, %v350, 0
      %v393 = vsel %vm355, %v351, 0
      %v396 = vsel %vm355, %v352, 0
      %v399 = vsel %vm355, %v353, 0
      %v402 = vsel %vm355, %v354, 0
      %404 = vmatprep.subr.mxu0 0.0
      %405 = vmatpush1.msra.mxu0 0.0
      %406 = vmatprep.subr.mxu0 0.0
      %407 = vmatpush1.msra.mxu0 0.0
      %408 = vmatprep.subr.mxu0 0.0
      %409 = vmatpush1.msra.mxu0 0.0
      %410 = vmatprep.subr.mxu0 0.0
      %411 = vmatpush1.msra.mxu0 0.0
      %412 = vmatprep.subr.mxu0 0.0
      %413 = vmatpush1.msra.mxu0 0.0
      %414 = vmatprep.subr.mxu0 0.0
      %415 = vmatpush1.msra.mxu0 0.0
      %416 = vmatprep.subr.mxu0 0.0
      %417 = vmatpush1.msra.mxu0 0.0
      %418 = vmatprep.subr.mxu0 0.0
      %419 = vmatpush1.msra.mxu0 0.0
      %420 = vmatprep.subr.mxu0 0.0
      %421 = vmatpush1.msra.mxu0 0.0
      %422 = vmatprep.subr.mxu0 0.0
      %423 = vmatpush1.msra.mxu0 0.0
      %424 = vmatprep.subr.mxu0 0.0
      %425 = vmatpush1.msra.mxu0 0.0
      %426 = vmatprep.subr.mxu0 0.0
      %427 = vmatpush1.msra.mxu0 0.0
      %428 = vmatprep.subr.mxu0 0.0
      %429 = vmatpush1.msra.mxu0 0.0
      %430 = vmatprep.subr.mxu0 0.0
      %431 = vmatpush1.msra.mxu0 0.0
      %432 = vmatprep.subr.mxu0 0.0
      %433 = vmatpush1.msra.mxu0 0.0
      %434 = vmatprep.subr.mxu0 0.0
      %435 = vmatpush1.msra.mxu0 %v338
      %436 = vmatprep.subr.mxu0 0.0
      %437 = vmatpush2.msra.mxu0 0.0
      %438 = vmatprep.subr.mxu0 0.0
      %439 = vmatpush2.msra.mxu0 0.0
      %440 = vmatprep.subr.mxu0 0.0
      %441 = vmatpush2.msra.mxu0 0.0
      %442 = vmatprep.subr.mxu0 0.0
      %443 = vmatpush2.msra.mxu0 0.0
      %444 = vmatprep.subr.mxu0 0.0
      %445 = vmatpush2.msra.mxu0 0.0
      %446 = vmatprep.subr.mxu0 0.0
      %447 = vmatpush2.msra.mxu0 0.0
      %448 = vmatprep.subr.mxu0 0.0
      %449 = vmatpush2.msra.mxu0 0.0
      %450 = vmatprep.subr.mxu0 0.0
      %451 = vmatpush2.msra.mxu0 0.0
      %452 = vmatprep.subr.mxu0 0.0
      %453 = vmatpush2.msra.mxu0 0.0
      %454 = vmatprep.subr.mxu0 0.0
      %455 = vmatpush2.msra.mxu0 0.0
      %456 = vmatprep.subr.mxu0 0.0
      %457 = vmatpush2.msra.mxu0 0.0
      %458 = vmatprep.subr.mxu0 0.0
      %459 = vmatpush2.msra.mxu0 0.0
      %460 = vmatprep.subr.mxu0 0.0
      %461 = vmatpush2.msra.mxu0 0.0
      %462 = vmatprep.subr.mxu0 0.0
      %463 = vmatpush2.msra.mxu0 0.0
      %464 = vmatprep.subr.mxu0 0.0
      %465 = vmatpush2.msra.mxu0 0.0
      %466 = vmatprep.subr.mxu0 0.0
      %467 = vmatpush2.msra.mxu0 0.0
      %468 = vmatprep.mubr.f32.mxu0 0.0
      %469 = vmatmul.mubr.f32.gmra.mxu0 %v357
      %v470 = vpop.f32.mrf.mxu0
      %v471 = vadd.f32 0.0, %v470
      %v472 = vpop.f32.mrf.mxu0
      %473 = vmatprep.mubr.f32.mxu0 0.0
      %474 = vmatmul.mubr.f32.gmra.mxu0 %v360
      %v475 = vpop.f32.mrf.mxu0
      %v476 = vadd.f32 0.0, %v475
      %v477 = vpop.f32.mrf.mxu0
      %478 = vmatprep.mubr.f32.mxu0 0.0
      %479 = vmatmul.mubr.f32.gmra.mxu0 %v363
      %v480 = vpop.f32.mrf.mxu0
      %v481 = vadd.f32 0.0, %v480
      %v482 = vpop.f32.mrf.mxu0
      %483 = vmatprep.mubr.f32.mxu0 0.0
      %484 = vmatmul.mubr.f32.gmra.mxu0 %v366
      %v485 = vpop.f32.mrf.mxu0
      %v486 = vadd.f32 0.0, %v485
      %v487 = vpop.f32.mrf.mxu0
      %488 = vmatprep.mubr.f32.mxu0 0.0
      %489 = vmatmul.mubr.f32.gmra.mxu0 %v369
      %v490 = vpop.f32.mrf.mxu0
      %v491 = vadd.f32 0.0, %v490
      %v492 = vpop.f32.mrf.mxu0
      %493 = vmatprep.mubr.f32.mxu0 0.0
      %494 = vmatmul.mubr.f32.gmra.mxu0 %v372
      %v495 = vpop.f32.mrf.mxu0
      %v496 = vadd.f32 0.0, %v495
      %v497 = vpop.f32.mrf.mxu0
      %498 = vmatprep.mubr.f32.mxu0 0.0
      %499 = vmatmul.mubr.f32.gmra.mxu0 %v375
      %v500 = vpop.f32.mrf.mxu0
      %v501 = vadd.f32 0.0, %v500
      %v502 = vpop.f32.mrf.mxu0
      %503 = vmatprep.mubr.f32.mxu0 0.0
      %504 = vmatmul.mubr.f32.gmra.mxu0 %v378
      %v505 = vpop.f32.mrf.mxu0
      %v506 = vadd.f32 0.0, %v505
      %v507 = vpop.f32.mrf.mxu0
      %508 = vmatprep.mubr.f32.mxu0 0.0
      %509 = vmatmul.mubr.f32.gmra.mxu0 %v381
      %v510 = vpop.f32.mrf.mxu0
      %v511 = vadd.f32 0.0, %v510
      %v512 = vpop.f32.mrf.mxu0
      %513 = vmatprep.mubr.f32.mxu0 0.0
      %514 = vmatmul.mubr.f32.gmra.mxu0 %v384
      %v515 = vpop.f32.mrf.mxu0
      %v516 = vadd.f32 0.0, %v515
      %v517 = vpop.f32.mrf.mxu0
      %518 = vmatprep.mubr.f32.mxu0 0.0
      %519 = vmatmul.mubr.f32.gmra.mxu0 %v387
      %v520 = vpop.f32.mrf.mxu0
      %v521 = vadd.f32 0.0, %v520
      %v522 = vpop.f32.mrf.mxu0
      %523 = vmatprep.mubr.f32.mxu0 0.0
      %524 = vmatmul.mubr.f32.gmra.mxu0 %v390
      %v525 = vpop.f32.mrf.mxu0
      %v526 = vadd.f32 0.0, %v525
      %v527 = vpop.f32.mrf.mxu0
      %528 = vmatprep.mubr.f32.mxu0 0.0
      %529 = vmatmul.mubr.f32.gmra.mxu0 %v393
      %v530 = vpop.f32.mrf.mxu0
      %v531 = vadd.f32 0.0, %v530
      %v532 = vpop.f32.mrf.mxu0
      %533 = vmatprep.mubr.f32.mxu0 0.0
      %534 = vmatmul.mubr.f32.gmra.mxu0 %v396
      %v535 = vpop.f32.mrf.mxu0
      %v536 = vadd.f32 0.0, %v535
      %v537 = vpop.f32.mrf.mxu0
      %538 = vmatprep.mubr.f32.mxu0 0.0
      %539 = vmatmul.mubr.f32.gmra.mxu0 %v399
      %v540 = vpop.f32.mrf.mxu0
      %v541 = vadd.f32 0.0, %v540
      %v542 = vpop.f32.mrf.mxu0
      %543 = vmatprep.mubr.f32.mxu0 0.0
      %544 = vmatmul.mubr.f32.gmra.mxu0 %v402
      %v545 = vpop.f32.mrf.mxu0
      %v546 = vadd.f32 0.0, %v545
      %v547 = vpop.f32.mrf.mxu0
      %548 = vdwg.mxu0
      %v549 = vxor.u32 %v471, 2147483648
      %v550 = vxor.u32 %v476, 2147483648
      %v551 = vxor.u32 %v481, 2147483648
      %v552 = vxor.u32 %v486, 2147483648
      %v553 = vxor.u32 %v491, 2147483648
      %v554 = vxor.u32 %v496, 2147483648
      %v555 = vxor.u32 %v501, 2147483648
      %v556 = vxor.u32 %v506, 2147483648
      %v557 = vxor.u32 %v511, 2147483648
      %v558 = vxor.u32 %v516, 2147483648
      %v559 = vxor.u32 %v521, 2147483648
      %v560 = vxor.u32 %v526, 2147483648
      %v561 = vxor.u32 %v531, 2147483648
      %v562 = vxor.u32 %v536, 2147483648
      %v563 = vxor.u32 %v541, 2147483648
      %v564 = vxor.u32 %v546, 2147483648
      %v565 = vmul.f32 %v549, 1.442695
      %v566 = vpow.pop %v565
      %v567 = vmul.f32 %v550, 1.442695
      %v568 = vpow.pop %v567
      %v569 = vmul.f32 %v551, 1.442695
      %v570 = vpow.pop %v569
      %v571 = vmul.f32 %v552, 1.442695
      %v572 = vpow.pop %v571
      %v573 = vmul.f32 %v553, 1.442695
      %v574 = vpow.pop %v573
      %v575 = vmul.f32 %v554, 1.442695
      %v576 = vpow.pop %v575
      %v577 = vmul.f32 %v555, 1.442695
      %v578 = vpow.pop %v577
      %v579 = vmul.f32 %v556, 1.442695
      %v580 = vpow.pop %v579
      %v581 = vmul.f32 %v557, 1.442695
      %v582 = vpow.pop %v581
      %v583 = vmul.f32 %v558, 1.442695
      %v584 = vpow.pop %v583
      %v585 = vmul.f32 %v559, 1.442695
      %v586 = vpow.pop %v585
      %v587 = vmul.f32 %v560, 1.442695
      %v588 = vpow.pop %v587
      %v589 = vmul.f32 %v561, 1.442695
      %v590 = vpow.pop %v589
      %v591 = vmul.f32 %v562, 1.442695
      %v592 = vpow.pop %v591
      %v593 = vmul.f32 %v563, 1.442695
      %v594 = vpow.pop %v593
      %v595 = vmul.f32 %v564, 1.442695
      %v596 = vpow.pop %v595
      %v597 = vadd.f32 %v566, 1.0
      %v598 = vadd.f32 %v568, 1.0
      %v599 = vadd.f32 %v570, 1.0
      %v600 = vadd.f32 %v572, 1.0
      %v601 = vadd.f32 %v574, 1.0
      %v602 = vadd.f32 %v576, 1.0
      %v603 = vadd.f32 %v578, 1.0
      %v604 = vadd.f32 %v580, 1.0
      %v605 = vadd.f32 %v582, 1.0
      %v606 = vadd.f32 %v584, 1.0
      %v607 = vadd.f32 %v586, 1.0
      %v608 = vadd.f32 %v588, 1.0
      %v609 = vadd.f32 %v590, 1.0
      %v610 = vadd.f32 %v592, 1.0
      %v611 = vadd.f32 %v594, 1.0
      %v612 = vadd.f32 %v596, 1.0
      %v613 = vrcp.pop %v597
      %v614 = vmul.f32 1.0, %v613
      %v615 = vrcp.pop %v598
      %v616 = vmul.f32 1.0, %v615
      %v617 = vrcp.pop %v599
      %v618 = vmul.f32 1.0, %v617
      %v619 = vrcp.pop %v600
      %v620 = vmul.f32 1.0, %v619
      %v621 = vrcp.pop %v601
      %v622 = vmul.f32 1.0, %v621
      %v623 = vrcp.pop %v602
      %v624 = vmul.f32 1.0, %v623
      %v625 = vrcp.pop %v603
      %v626 = vmul.f32 1.0, %v625
      %v627 = vrcp.pop %v604
      %v628 = vmul.f32 1.0, %v627
      %v629 = vrcp.pop %v605
      %v630 = vmul.f32 1.0, %v629
      %v631 = vrcp.pop %v606
      %v632 = vmul.f32 1.0, %v631
      %v633 = vrcp.pop %v607
      %v634 = vmul.f32 1.0, %v633
      %v635 = vrcp.pop %v608
      %v636 = vmul.f32 1.0, %v635
      %v637 = vrcp.pop %v609
      %v638 = vmul.f32 1.0, %v637
      %v639 = vrcp.pop %v610
      %v640 = vmul.f32 1.0, %v639
      %v641 = vrcp.pop %v611
      %v642 = vmul.f32 1.0, %v641
      %v643 = vrcp.pop %v612
      %v644 = vmul.f32 1.0, %v643
      %646 = vset.pattern.permute.xlu0 0
      %647 = vperm.xlu0 %646, %v614
      %v648 = vpop.permute.xlu0 %647
      %651 = vset.pattern.permute.xlu0 0
      %652 = vperm.xlu0 %651, %v616
      %v653 = vpop.permute.xlu0 %652
      %656 = vset.pattern.permute.xlu0 0
      %657 = vperm.xlu0 %656, %v618
      %v658 = vpop.permute.xlu0 %657
      %661 = vset.pattern.permute.xlu0 0
      %662 = vperm.xlu0 %661, %v620
      %v663 = vpop.permute.xlu0 %662
      %666 = vset.pattern.permute.xlu0 0
      %667 = vperm.xlu0 %666, %v622
      %v668 = vpop.permute.xlu0 %667
      %671 = vset.pattern.permute.xlu0 0
      %672 = vperm.xlu0 %671, %v624
      %v673 = vpop.permute.xlu0 %672
      %676 = vset.pattern.permute.xlu0 0
      %677 = vperm.xlu0 %676, %v626
      %v678 = vpop.permute.xlu0 %677
      %681 = vset.pattern.permute.xlu0 0
      %682 = vperm.xlu0 %681, %v628
      %v683 = vpop.permute.xlu0 %682
      %686 = vset.pattern.permute.xlu0 0
      %687 = vperm.xlu0 %686, %v630
      %v688 = vpop.permute.xlu0 %687
      %691 = vset.pattern.permute.xlu0 0
      %692 = vperm.xlu0 %691, %v632
      %v693 = vpop.permute.xlu0 %692
      %696 = vset.pattern.permute.xlu0 0
      %697 = vperm.xlu0 %696, %v634
      %v698 = vpop.permute.xlu0 %697
      %701 = vset.pattern.permute.xlu0 0
      %702 = vperm.xlu0 %701, %v636
      %v703 = vpop.permute.xlu0 %702
      %706 = vset.pattern.permute.xlu0 0
      %707 = vperm.xlu0 %706, %v638
      %v708 = vpop.permute.xlu0 %707
      %711 = vset.pattern.permute.xlu0 0
      %712 = vperm.xlu0 %711, %v640
      %v713 = vpop.permute.xlu0 %712
      %716 = vset.pattern.permute.xlu0 0
      %717 = vperm.xlu0 %716, %v642
      %v718 = vpop.permute.xlu0 %717
      %721 = vset.pattern.permute.xlu0 0
      %722 = vperm.xlu0 %721, %v644
      %v723 = vpop.permute.xlu0 %722
      %v725 = vmul.f32 %v171, %v648
      %v726 = vmul.f32 %v172, %v648
      %v727 = vmul.f32 %v173, %v653
      %v728 = vmul.f32 %v174, %v653
      %v729 = vmul.f32 %v175, %v658
      %v730 = vmul.f32 %v176, %v658
      %v731 = vmul.f32 %v177, %v663
      %v732 = vmul.f32 %v178, %v663
      %v733 = vmul.f32 %v179, %v668
      %v734 = vmul.f32 %v180, %v668
      %v735 = vmul.f32 %v181, %v673
      %v736 = vmul.f32 %v182, %v673
      %v737 = vmul.f32 %v183, %v678
      %v738 = vmul.f32 %v184, %v678
      %v739 = vmul.f32 %v185, %v683
      %v740 = vmul.f32 %v186, %v683
      %v741 = vmul.f32 %v187, %v688
      %v742 = vmul.f32 %v188, %v688
      %v743 = vmul.f32 %v189, %v693
      %v744 = vmul.f32 %v190, %v693
      %v745 = vmul.f32 %v191, %v698
      %v746 = vmul.f32 %v192, %v698
      %v747 = vmul.f32 %v193, %v703
      %v748 = vmul.f32 %v194, %v703
      %v749 = vmul.f32 %v195, %v708
      %v750 = vmul.f32 %v196, %v708
      %v751 = vmul.f32 %v197, %v713
      %v752 = vmul.f32 %v198, %v713
      %v753 = vmul.f32 %v199, %v718
      %v754 = vmul.f32 %v200, %v718
      %v755 = vmul.f32 %v201, %v723
      %v756 = vmul.f32 %v202, %v723
      %757 = vst [vmem:[%s170] sm:$0xff] %v725
      %758 = vst [vmem:[%s170 + $0x8] sm:$0xff] %v726
      %759 = vst [vmem:[%s170 + $0x10] sm:$0xff] %v727
      %760 = vst [vmem:[%s170 + $0x18] sm:$0xff] %v728
      %761 = vst [vmem:[%s170 + $0x20] sm:$0xff] %v729
      %762 = vst [vmem:[%s170 + $0x28] sm:$0xff] %v730
      %763 = vst [vmem:[%s170 + $0x30] sm:$0xff] %v731
      %764 = vst [vmem:[%s170 + $0x38] sm:$0xff] %v732
      %765 = vst [vmem:[%s170 + $0x40] sm:$0xff] %v733
      %766 = vst [vmem:[%s170 + $0x48] sm:$0xff] %v734
      %767 = vst [vmem:[%s170 + $0x50] sm:$0xff] %v735
      %768 = vst [vmem:[%s170 + $0x58] sm:$0xff] %v736
      %769 = vst [vmem:[%s170 + $0x60] sm:$0xff] %v737
      %770 = vst [vmem:[%s170 + $0x68] sm:$0xff] %v738
      %771 = vst [vmem:[%s170 + $0x70] sm:$0xff] %v739
      %772 = vst [vmem:[%s170 + $0x78] sm:$0xff] %v740
      %773 = vst [vmem:[%s170 + $0x80] sm:$0xff] %v741
      %774 = vst [vmem:[%s170 + $0x88] sm:$0xff] %v742
      %775 = vst [vmem:[%s170 + $0x90] sm:$0xff] %v743
      %776 = vst [vmem:[%s170 + $0x98] sm:$0xff] %v744
      %777 = vst [vmem:[%s170 + $0xa0] sm:$0xff] %v745
      %778 = vst [vmem:[%s170 + $0xa8] sm:$0xff] %v746
      %779 = vst [vmem:[%s170 + $0xb0] sm:$0xff] %v747
      %780 = vst [vmem:[%s170 + $0xb8] sm:$0xff] %v748
      %781 = vst [vmem:[%s170 + $0xc0] sm:$0xff] %v749
      %782 = vst [vmem:[%s170 + $0xc8] sm:$0xff] %v750
      %783 = vst [vmem:[%s170 + $0xd0] sm:$0xff] %v751
      %784 = vst [vmem:[%s170 + $0xd8] sm:$0xff] %v752
      %785 = vst [vmem:[%s170 + $0xe0] sm:$0xff] %v753
      %786 = vst [vmem:[%s170 + $0xe8] sm:$0xff] %v754
      %787 = vst [vmem:[%s170 + $0xf0] sm:$0xff] %v755
      %788 = vst [vmem:[%s170 + $0xf8] sm:$0xff] %v756
      %p789 = scmp.lt.s32.totalorder %s14, 1
      %s790 = scalar_select %p789, %s14, 1
      %s791 = smul.addr %s790, 32
      %s792 = smul.addr %s791, 8
      %s793 = scalar_lea.vmem %s3, %s792
      // Predicated region
      $region33: #{se_block.1} parent=31 // pred_check
        %p794 = pneg %p100
      $region34: #{se_block.1} parent=31 // pred_check_branch
        %796 = sbr.rel (%p794) target = $region36
      $region35: #{se_block.1} parent=31 // pred_region
        _
      $region36: #{se_block.1} parent=31 // pred_fallthru
        _
    $region32: #{se_block.1} parent=5 // pred_fallthru
      _
    %p797 = scmp.le.s32.totalorder 2, %s9
    // Predicated region
    $region37: #{se_block.1} parent=5 // pred_check
      %p798 = pneg %p797
    $region38: #{se_block.1} parent=5 // pred_check_branch
      %800 = sbr.rel (%p798) target = $region40
    $region39: #{se_block.1} parent=5 // pred_region
      %s801 = ssub.s32 %s9, 2
      // Predicated region
      $region41: #{se_block.1} parent=39 // pred_check
        %p802 = pneg %p106
      $region42: #{se_block.1} parent=39 // pred_check_branch
        %804 = sbr.rel (%p802) target = $region44
      $region43: #{se_block.1} parent=39 // pred_region
        %p805 = scmp.lt.s32.totalorder %s15, 1
        %s806 = scalar_select %p805, %s15, 1
        %s807 = smul.addr %s806, 32
        %s808 = smul.addr %s807, 8
        %s809 = scalar_lea.vmem %s3, %s808
      $region44: #{se_block.1} parent=39 // pred_fallthru
        _
    $region40: #{se_block.1} parent=5 // pred_fallthru
      _
  $region6: #{se_block.1} parent=0 // loop_footer
    %s13 = sadd.s32 1, %s9
  $region7: #{se_block.1} parent=0 // loop_footer_branch
    %8 = sbr.rel target = $region3
  $region8: #{se_block.1} parent=0 // loop_exit
    _

</llo_original>
